<compile_context>
chip_gen: v6e
topology: v6e:2x2x1
jax: 0.10.0
libtpu: 0.0.40
codegen_flags: <defaults>
</compile_context>

<pallas_src>
import jax
import jax.numpy as jnp
from jax.experimental import pallas as pl
from jax.experimental.pallas import tpu as pltpu

MAX_BLOCK_ROWS = 512   # multiple of 32 -> valid for f32/bf16/int8 sublane tiling
WIDE_LANES = 512       # lane-dense width for large tensors
MIN_LANES = 128


def _round_up(x, m):
    return ((x + m - 1) // m) * m


def _make_observer_kernel(block_rows, sub):
    """Kernel: fold a (block_rows, lanes) block into (sub, lanes) partial min/max."""

    def kernel(x_ref, min_ref, max_ref):
        # First chunk initializes the running partials (no +/-inf fill needed).
        first = x_ref[0:sub, :]
        part_min = first
        part_max = first
        # Static (unrolled) loop over sublane-aligned chunks: pure VPU work,
        # per-chunk loads keep register pressure low and hide under the DMA.
        for r in range(sub, block_rows, sub):
            chunk = x_ref[r:r + sub, :]
            part_min = jnp.minimum(part_min, chunk)
            part_max = jnp.maximum(part_max, chunk)
        min_ref[...] = part_min.astype(jnp.float32)
        max_ref[...] = part_max.astype(jnp.float32)

    return kernel


def observer_forward(x):
    """Observer forward: returns (x, min_val, max_val).

    Works for arbitrary shapes/sizes (tensor is flattened; the ragged tail is
    edge-padded, which is exact for min/max).
    """
    flat = x.reshape(-1)
    n = flat.shape[0]

    itemsize = jnp.dtype(x.dtype).itemsize
    sub = {4: 8, 2: 16, 1: 32}.get(itemsize, 8)   # dtype-dependent sublane tile

    # Lane-dense width for big tensors, 128 for small ones (less padding).
    lanes = WIDE_LANES if n >= WIDE_LANES * sub else MIN_LANES

    rows = pl.cdiv(n, lanes)
    block_rows = min(MAX_BLOCK_ROWS, _round_up(rows, sub))
    padded_rows = _round_up(rows, block_rows)
    pad = padded_rows * lanes - n
    if pad:
        # edge padding repeats a real element -> min/max unchanged
        flat = jnp.pad(flat, (0, pad), mode="edge")
    x2d = flat.reshape(padded_rows, lanes)

    num_steps = padded_rows // block_rows
    grid = (num_steps,)

    kernel = _make_observer_kernel(block_rows, sub)

    part_min, part_max = pl.pallas_call(
        kernel,
        out_shape=(
            jax.ShapeDtypeStruct((num_steps * sub, lanes), jnp.float32),
            jax.ShapeDtypeStruct((num_steps * sub, lanes), jnp.float32),
        ),
        grid=grid,
        in_specs=[pl.BlockSpec((block_rows, lanes), lambda i: (i, 0))],
        out_specs=(
            pl.BlockSpec((sub, lanes), lambda i: (i, 0)),
            pl.BlockSpec((sub, lanes), lambda i: (i, 0)),
        ),
        compiler_params=pltpu.CompilerParams(
            dimension_semantics=("parallel",),   # no carried state -> megacore-friendly
        ),
    )(x2d)

    # Tiny final cross-lane reduce on the partials (cheap XLA op).
    min_val = jnp.min(part_min)
    max_val = jnp.max(part_max)

    # Identity pass-through: return the input directly (no copy through HBM).
    return x, min_val, max_val


def calculate_qparams(min_val, max_val, quant_min=0, quant_max=255):
    """Plain-JAX glue mirroring MinMaxObserver.calculate_qparams (quint8/affine)."""
    min_v = jnp.minimum(min_val, 0.0)
    max_v = jnp.maximum(max_val, 0.0)
    scale = (max_v - min_v) / float(quant_max - quant_min)
    scale = jnp.maximum(scale, jnp.finfo(jnp.float32).eps)
    zero_point = quant_min - jnp.round(min_v / scale)
    zero_point = jnp.clip(zero_point, quant_min, quant_max).astype(jnp.int32)
    return scale, zero_point


# TODO(synk): ObserverBase.forward / calculate_qparams / get_qparams are
# abstract in PyTorch; this implements the canonical MinMaxObserver semantics.
# The _with_args class-factory helper is pure Python plumbing with no kernel
# equivalent.

if __name__ == "__main__":
    key = jax.random.PRNGKey(0)

    # Canonical small NCHW input implied by the observer usage.
    x = jax.random.normal(key, (2, 4, 16, 16), dtype=jnp.float32)

    y, min_val, max_val = observer_forward(x)
    scale, zero_point = calculate_qparams(min_val, max_val)
    jax.block_until_ready((y, min_val, max_val, scale, zero_point))

    assert jnp.allclose(y, x), "identity pass-through mismatch"
    assert jnp.allclose(min_val, jnp.min(x)), "min mismatch"
    assert jnp.allclose(max_val, jnp.max(x)), "max mismatch"

    # Ragged shape to exercise the padding / partial-tile path.
    x2 = jax.random.normal(jax.random.PRNGKey(1), (3, 5, 7, 11), dtype=jnp.float32)
    y2, mn2, mx2 = observer_forward(x2)
    jax.block_until_ready((y2, mn2, mx2))
    assert jnp.allclose(y2, x2), "identity pass-through mismatch (ragged)"
    assert jnp.allclose(mn2, jnp.min(x2)), "min mismatch (ragged)"
    assert jnp.allclose(mx2, jnp.max(x2)), "max mismatch (ragged)"

    print("KERNEL_OK")
</pallas_src>

<mosaic_0001>
module attributes {stable_mosaic.version = 11 : i64} {
  func.func @kernel(%arg0: i32, %arg1: memref<16x128xf32, #tpu.memory_space<vmem>>, %arg2: memref<8x128xf32, #tpu.memory_space<vmem>>, %arg3: memref<8x128xf32, #tpu.memory_space<vmem>>) attributes {dimension_semantics = [#tpu.dimension_semantics<parallel>], iteration_bounds = array<i64: 1>, scalar_prefetch = 0 : i64, scratch_operands = 0 : i64, tpu.core_type = #tpu.core_type<tc>, window_params = [{transform_indices = @transform_0, window_bounds = array<i64: 16, 128>}, {transform_indices = @transform_1, window_bounds = array<i64: 8, 128>}, {transform_indices = @transform_2, window_bounds = array<i64: 8, 128>}]} {
    %c0 = arith.constant 0 : index
    %c0_0 = arith.constant 0 : index
    %0 = vector.load %arg1[%c0, %c0_0] : memref<16x128xf32, #tpu.memory_space<vmem>>, vector<8x128xf32>
    %c8 = arith.constant 8 : index
    %c0_1 = arith.constant 0 : index
    %1 = vector.load %arg1[%c8, %c0_1] : memref<16x128xf32, #tpu.memory_space<vmem>>, vector<8x128xf32>
    %2 = arith.minimumf %0, %1 : vector<8x128xf32>
    %3 = arith.maximumf %0, %1 : vector<8x128xf32>
    %c0_2 = arith.constant 0 : index
    %c0_3 = arith.constant 0 : index
    %4 = vector.load %arg2[%c0_2, %c0_3] : memref<8x128xf32, #tpu.memory_space<vmem>>, vector<8x128xf32>
    tpu.vector_store %arg2[%c0_2, %c0_3], %2 {strides = array<i32>} : memref<8x128xf32, #tpu.memory_space<vmem>>, vector<8x128xf32>,
    %c0_4 = arith.constant 0 : index
    %c0_5 = arith.constant 0 : index
    %5 = vector.load %arg3[%c0_4, %c0_5] : memref<8x128xf32, #tpu.memory_space<vmem>>, vector<8x128xf32>
    tpu.vector_store %arg3[%c0_4, %c0_5], %3 {strides = array<i32>} : memref<8x128xf32, #tpu.memory_space<vmem>>, vector<8x128xf32>,
    return
  }
  func.func @transform_0(%arg0: i32) -> (i32, i32) {
    %c0_i32 = arith.constant 0 : i32
    %c0_i32_0 = arith.constant 0 : i32
    return %arg0, %c0_i32 : i32, i32
  }
  func.func @transform_1(%arg0: i32) -> (i32, i32) {
    %c0_i32 = arith.constant 0 : i32
    %c0_i32_0 = arith.constant 0 : i32
    return %arg0, %c0_i32 : i32, i32
  }
  func.func @transform_2(%arg0: i32) -> (i32, i32) {
    %c0_i32 = arith.constant 0 : i32
    %c0_i32_0 = arith.constant 0 : i32
    return %arg0, %c0_i32 : i32, i32
  }
}

</mosaic_0001>

<llo_original>
// kernel: tpu_custom_call.1
$region0: #{tpu_custom_call.1}
  #allocation0 [shape = 'u32[]', space=smem, size = 0x4, offset = 0x4, fixed_abs, tag = 'smem constant byte address 0x4 - core index']
  #allocation1 [shape = 'u32[144,128]{1,0:T(1,128)}', space=vmem, size = 0x12000, scoped, tag = 'internal scratch']
  %s0 = inlined_call_operand.hbm [shape: f32[16,128], index: 0, kind: input, shape index: {}]
  %s1 = inlined_call_operand.hbm [shape: f32[8,128], index: 1, kind: output, shape index: {0}]
  %s2 = inlined_call_operand.hbm [shape: f32[8,128], index: 2, kind: output, shape index: {1}]
  %3 = xla_tuple %s1, %s2
  %s4 = sld [smem:[#allocation0]]
  $region26: #{tpu_custom_call.1} parent=0
    _
  %s6 = ssub.s32 1, %s4
  %s7 = scalar_select 0, %s6, %s4
  $region1: #{tpu_custom_call.1} parent=0
    #allocation2 [shape = 'u8[8192]{0}', space=vmem, size = 0x2000, scoped, tag = 'input window, operand 0, single buffered']
    #allocation3 [shape = 's32[1]{0}', space=sflag, size = 0x4, scoped, tag = 'scoped memory for tpu_custom_call.1']
    #allocation4 [shape = 's32[1]{0}', space=sflag, size = 0x4, scoped, tag = 'scoped memory for tpu_custom_call.1']
    #allocation5 [shape = 'u8[4096]{0}', space=vmem, size = 0x1000, scoped, tag = 'output window, operand 0, single buffered']
    #allocation6 [shape = 'u8[4096]{0}', space=vmem, size = 0x1000, scoped, tag = 'output window, operand 1, single buffered']
    #allocation7 [shape = 's32[1]{0}', space=sflag, size = 0x4, scoped, tag = 'scoped memory for tpu_custom_call.1']
    %8 = vsyncpa [#allocation3], 0
    %9 = vsyncpa [#allocation4], 0
    %10 = vsyncpa [#allocation7], 0
    // Predicated region
    $region2: #{tpu_custom_call.1} parent=1 // pred_check
      _
    $region3: #{tpu_custom_call.1} parent=1 // pred_check_branch
      %12 = sbr.rel (0) target = $region5
    $region4: #{tpu_custom_call.1} parent=1 // pred_region
      %s14 = ssub.s32 256, 256
      %15 = vsyncadd [#allocation3], %s14
      %s16 = sshll.u32 [#allocation2], 4
      %s17 = int_to_ptr.vmem [resolvable:$true] %s16
      %22 = dma.hbm_to_vmem [thread:$0]  %s0, 256, %s17, [#allocation3], 128, 128, 8
    $region5: #{tpu_custom_call.1} parent=1 // pred_fallthru
      _
    // Predicated region
    $region6: #{tpu_custom_call.1} parent=1 // pred_check
      _
    $region7: #{tpu_custom_call.1} parent=1 // pred_check_branch
      %24 = sbr.rel (0) target = $region9
    $region8: #{tpu_custom_call.1} parent=1 // pred_region
      %25 = dma.done [#allocation3], 256
    $region9: #{tpu_custom_call.1} parent=1 // pred_fallthru
      _
    %v26 = vld [vmem:[#allocation2] sm:$0xff]
    %v27 = vld [vmem:[#allocation2 + $0x8] sm:$0xff]
    %v28 = vmin.f32 %v26, %v27
    %v29 = vmax.f32 %v26, %v27
    %30 = vst [vmem:[#allocation5] sm:$0xff] %v28
    %31 = vst [vmem:[#allocation6] sm:$0xff] %v29
    // Predicated region
    $region10: #{tpu_custom_call.1} parent=1 // pred_check
      _
    $region11: #{tpu_custom_call.1} parent=1 // pred_check_branch
      %33 = sbr.rel (0) target = $region13
    $region12: #{tpu_custom_call.1} parent=1 // pred_region
      %s35 = ssub.s32 128, 128
      %36 = vsyncadd [#allocation4], %s35
      %s38 = sshll.u32 [#allocation5], 4
      %s39 = int_to_ptr.vmem [resolvable:$true] %s38
      %41 = dma.vmem_to_hbm [thread:$0]  %s39, 128, %s1, [#allocation4]
    $region13: #{tpu_custom_call.1} parent=1 // pred_fallthru
      _
    // Predicated region
    $region14: #{tpu_custom_call.1} parent=1 // pred_check
      _
    $region15: #{tpu_custom_call.1} parent=1 // pred_check_branch
      %43 = sbr.rel (0) target = $region17
    $region16: #{tpu_custom_call.1} parent=1 // pred_region
      %s45 = ssub.s32 128, 128
      %46 = vsyncadd [#allocation7], %s45
      %s48 = sshll.u32 [#allocation6], 4
      %s49 = int_to_ptr.vmem [resolvable:$true] %s48
      %51 = dma.vmem_to_hbm [thread:$0]  %s49, 128, %s2, [#allocation7]
    $region17: #{tpu_custom_call.1} parent=1 // pred_fallthru
      _
    // Predicated region
    $region18: #{tpu_custom_call.1} parent=1 // pred_check
      _
    $region19: #{tpu_custom_call.1} parent=1 // pred_check_branch
      %53 = sbr.rel (0) target = $region21
    $region20: #{tpu_custom_call.1} parent=1 // pred_region
      %54 = dma.done [#allocation4], 128
    $region21: #{tpu_custom_call.1} parent=1 // pred_fallthru
      _
    // Predicated region
    $region22: #{tpu_custom_call.1} parent=1 // pred_check
      _
    $region23: #{tpu_custom_call.1} parent=1 // pred_check_branch
      %56 = sbr.rel (0) target = $region25
    $region24: #{tpu_custom_call.1} parent=1 // pred_region
      %57 = dma.done [#allocation7], 128
    $region25: #{tpu_custom_call.1} parent=1 // pred_fallthru
      _
    %58 = vsyncpa [#allocation3], 1
    %59 = vsyncpa [#allocation4], 1
    %60 = vsyncpa [#allocation7], 1

</llo_original>
